<compile_context>
chip_gen: v7x
topology: tpu7x:2x2x1
jax: 0.10.0
libtpu: 0.0.40
codegen_flags: <defaults>
</compile_context>

<pallas_src>
import functools

import jax
import jax.numpy as jnp
from jax import lax
from jax.experimental import pallas as pl
from jax.experimental.pallas import tpu as pltpu


def _ceil_div(a: int, b: int) -> int:
    return -(-a // b)


def _fold_chunks(x_ref, tm, n_full, rem_lanes):
    """Fold lane-chunks of the current (tm, thw) tile into an f32 (tm, 128)
    partial sum: `n_full` complete 128-lane chunks plus an optional tail chunk
    of which only the first `rem_lanes` lanes are valid (the rest may hold
    garbage from an out-of-bounds HBM read and is masked to zero)."""

    def load(c):
        start = pl.multiple_of(c * 128, 128)
        return x_ref[:, pl.ds(start, 128)].astype(jnp.float32)

    if n_full == 0:
        partial = jnp.zeros((tm, 128), jnp.float32)
    elif n_full == 1:
        partial = load(0)
    else:
        partial = lax.fori_loop(1, n_full, lambda c, p: p + load(c), load(0),
                                unroll=min(8, n_full - 1))

    if rem_lanes:
        lane = lax.broadcasted_iota(jnp.int32, (1, 128), 1)
        tail = jnp.where(lane < rem_lanes, load(n_full), 0.0)
        partial = partial + tail
    return partial


def _gap_kernel(x_ref, o_ref, acc_ref, *, inv_hw, chunks_per_tile,
                last_full_chunks, last_rem, single_hw_tile):
    tm = x_ref.shape[0]

    if single_hw_tile:
        # Whole H*W fits in one tile: no cross-step accumulator needed.
        partial = _fold_chunks(x_ref, tm, last_full_chunks, last_rem)
        total = jnp.sum(partial, axis=-1, keepdims=True)           # (tm, 1)
        o_ref[...] = (total * inv_hw).astype(o_ref.dtype)
        return

    k = pl.program_id(1)
    n_k = pl.num_programs(1)

    @pl.when(k == 0)
    def _init():
        acc_ref[...] = jnp.zeros_like(acc_ref)

    ragged = (last_full_chunks != chunks_per_tile) or (last_rem != 0)
    if not ragged:
        acc_ref[...] += _fold_chunks(x_ref, tm, chunks_per_tile, 0)
    else:
        @pl.when(k < n_k - 1)
        def _full_tiles():
            acc_ref[...] += _fold_chunks(x_ref, tm, chunks_per_tile, 0)

        @pl.when(k == n_k - 1)
        def _ragged_tile():
            acc_ref[...] += _fold_chunks(x_ref, tm, last_full_chunks, last_rem)

    @pl.when(k == n_k - 1)
    def _finalize():
        # One cross-lane (XLU) reduce per row tile, scaled by the TRUE 1/(H*W).
        total = jnp.sum(acc_ref[...], axis=-1, keepdims=True)      # (tm, 1)
        o_ref[...] = (total * inv_hw).astype(o_ref.dtype)


def downsample(x: jax.Array, *, tm_max: int = 2048, thw_max: int = 16384,
               tile_budget_bytes: int = 8 * 1024 * 1024,
               vmem_limit_bytes: int = 48 * 1024 * 1024) -> jax.Array:
    """x: (N, C, H, W) -> (N, C), like AdaptiveAvgPool2d((1,1)) + flatten(1)."""
    N, C, H, W = x.shape
    rows, hw = N * C, H * W
    itemsize = jnp.dtype(x.dtype).itemsize

    x2 = x.reshape(rows, hw)             # contiguous NCHW -> free reshape

    # Dtype-aware sublane unit for the row (second-to-last) block dim.
    sub = max(8, 32 // itemsize)         # f32 -> 8, bf16 -> 16, int8/fp8 -> 32

    # --- HW (reduction) tiling: balanced 128-lane units, capped at thw_max. -
    hw_units = _ceil_div(hw, 128)
    max_hw_units = max(1, thw_max // 128)
    n_hw_tiles = _ceil_div(hw_units, max_hw_units)
    units_per_hw_tile = _ceil_div(hw_units, n_hw_tiles)
    thw = units_per_hw_tile * 128
    n_hw_tiles = _ceil_div(hw_units, units_per_hw_tile)
    chunks_per_tile = thw // 128
    last_valid = hw - (n_hw_tiles - 1) * thw       # valid lanes in last HW tile
    last_full_chunks = last_valid // 128
    last_rem = last_valid % 128

    # --- Row ("parallel") tiling. -------------------------------------------
    # Target ~tile_budget bytes per grid step (amortizes ~0.35us/step pipeline
    # overhead).  With many lane chunks, cap tm at 128 so the fold-loop
    # (tm,128) f32 carry stays register-resident (no spills).
    row_units = _ceil_div(rows, sub)
    tm_cap = tm_max if chunks_per_tile <= 4 else 128
    tm_budget = max(sub, (tile_budget_bytes // (thw * itemsize)) // sub * sub)
    tm = min(tm_cap, tm_budget, row_units * sub)
    n_row_tiles = _ceil_div(row_units, tm // sub)
    # Megacore (v7x): give the "parallel" axis >= 2 tiles whenever rows allow.
    if n_row_tiles < 2 and row_units >= 2:
        units_per_row_tile = _ceil_div(row_units, 2)
        tm = units_per_row_tile * sub
        n_row_tiles = _ceil_div(row_units, units_per_row_tile)

    grid = (n_row_tiles, n_hw_tiles)
    single_hw_tile = n_hw_tiles == 1
    acc_rows = 8 if single_hw_tile else tm          # scratch unused if single

    kernel = functools.partial(
        _gap_kernel,
        inv_hw=1.0 / float(hw),
        chunks_per_tile=chunks_per_tile,
        last_full_chunks=last_full_chunks,
        last_rem=last_rem,
        single_hw_tile=single_hw_tile,
    )

    out = pl.pallas_call(
        kernel,
        out_shape=jax.ShapeDtypeStruct((rows, 1), x.dtype),
        grid_spec=pltpu.PrefetchScalarGridSpec(
            num_scalar_prefetch=0,
            grid=grid,
            in_specs=[pl.BlockSpec((tm, thw), lambda i, k: (i, k))],
            out_specs=pl.BlockSpec((tm, 1), lambda i, k: (i, 0)),
            scratch_shapes=[pltpu.VMEM((acc_rows, 128), jnp.float32)],
        ),
        compiler_params=pltpu.CompilerParams(
            dimension_semantics=("parallel", "arbitrary"),
            vmem_limit_bytes=vmem_limit_bytes,
        ),
        cost_estimate=pl.CostEstimate(
            flops=rows * hw,
            transcendentals=0,
            bytes_accessed=rows * hw * itemsize + rows * itemsize,
        ),
    )(x2)

    return out[:, 0].reshape(N, C)


if __name__ == "__main__":
    # Downsample has no learnable parameters (__init__ only builds pool/flatten).
    key = jax.random.PRNGKey(0)
    k_a, k_b = jax.random.split(key)

    # Aligned small shape.
    x = jax.random.normal(k_a, (2, 4, 16, 16), dtype=jnp.float32)
    out = jax.block_until_ready(downsample(x))
    ref = jnp.mean(x, axis=(2, 3))                  # (N, C)
    assert out.shape == (2, 4), out.shape
    assert jnp.allclose(out, ref, atol=1e-5, rtol=1e-5), "mismatch (aligned)"

    # Ragged shape: H*W=49 (not a multiple of 128) and N*C=6 (not a multiple
    # of 8) exercises the in-kernel lane mask and partial row blocks (no pad).
    x_r = jax.random.normal(k_b, (2, 3, 7, 7), dtype=jnp.float32)
    out_r = jax.block_until_ready(downsample(x_r))
    ref_r = jnp.mean(x_r, axis=(2, 3))
    assert out_r.shape == (2, 3), out_r.shape
    assert jnp.allclose(out_r, ref_r, atol=1e-5, rtol=1e-5), "mismatch (ragged)"

    print("KERNEL_OK")
</pallas_src>

<mosaic_0001>
module attributes {stable_mosaic.version = 11 : i64} {
  func.func @_gap_kernel(%arg0: i32, %arg1: i32, %arg2: memref<8x256xf32, #tpu.memory_space<vmem>>, %arg3: memref<8x1xf32, #tpu.memory_space<vmem>>, %arg4: memref<8x128xf32, #tpu.memory_space<vmem>>) attributes {dimension_semantics = [#tpu.dimension_semantics<parallel>, #tpu.dimension_semantics<arbitrary>], iteration_bounds = array<i64: 1, 1>, scalar_prefetch = 0 : i64, scratch_operands = 1 : i64, tpu.core_type = #tpu.core_type<tc>, window_params = [{transform_indices = @transform_0, window_bounds = array<i64: 8, 256>}, {transform_indices = @transform_1, window_bounds = array<i64: 8, 1>}]} {
    %c0_i32 = arith.constant 0 : i32
    %0 = tpu.assume_multiple %c0_i32, 128 : i32
    %c0 = arith.constant 0 : index
    %1 = arith.index_cast %0 : i32 to index
    %2 = vector.load %arg2[%c0, %1] : memref<8x256xf32, #tpu.memory_space<vmem>>, vector<8x128xf32>
    %c1_i32 = arith.constant 1 : i32
    %c128_i32 = arith.constant 128 : i32
    %3 = arith.muli %c1_i32, %c128_i32 : i32
    %4 = tpu.assume_multiple %3, 128 : i32
    %c0_0 = arith.constant 0 : index
    %5 = arith.index_cast %4 : i32 to index
    %6 = vector.load %arg2[%c0_0, %5] : memref<8x256xf32, #tpu.memory_space<vmem>>, vector<8x128xf32>
    %7 = arith.addf %2, %6 : vector<8x128xf32>
    %c1_i32_1 = arith.constant 1 : i32
    %cst = arith.constant dense<0.000000e+00> : vector<8xf32>
    %8 = vector.multi_reduction <add>, %7, %cst [1] : vector<8x128xf32> to vector<8xf32>
    %9 = vector.shape_cast %8 : vector<8xf32> to vector<8x1xf32>
    %cst_2 = arith.constant 3.906250e-03 : f32
    %10 = vector.broadcast %cst_2 : f32 to vector<8x1xf32>
    %11 = arith.mulf %9, %10 : vector<8x1xf32>
    %c0_3 = arith.constant 0 : index
    %c0_4 = arith.constant 0 : index
    %12 = vector.load %arg3[%c0_3, %c0_4] : memref<8x1xf32, #tpu.memory_space<vmem>>, vector<8x1xf32>
    tpu.vector_store %arg3[%c0_3, %c0_4], %11 {strides = array<i32>} : memref<8x1xf32, #tpu.memory_space<vmem>>, vector<8x1xf32>,
    return
  }
  func.func @transform_0(%arg0: i32, %arg1: i32) -> (i32, i32) {
    %c0_i32 = arith.constant 0 : i32
    return %arg0, %arg1 : i32, i32
  }
  func.func @transform_1(%arg0: i32, %arg1: i32) -> (i32, i32) {
    %c0_i32 = arith.constant 0 : i32
    %c0_i32_0 = arith.constant 0 : i32
    return %arg0, %c0_i32 : i32, i32
  }
}

</mosaic_0001>

<llo_original>
// kernel: tpu_custom_call.1
$region0: #{tpu_custom_call.1}
  #allocation0 [shape = 'u32[]', space=smem, size = 0x4, offset = 0x4, fixed_abs, tag = 'smem constant byte address 0x4 - core index']
  #allocation1 [shape = 'u32[144,128]{1,0:T(1,128)}', space=vmem, size = 0x12000, scoped, tag = 'internal scratch']
  #allocation2 [shape = 'f32[8,128]{1,0:T(8,128)}', space=vmem, size = 0x1000, scoped, tag = 'scratch operand']
  %s0 = inlined_call_operand.hbm [shape: f32[8,256], index: 0, kind: input, shape index: {}]
  %s1 = inlined_call_operand.vmem [shape: f32[8,1], index: 1, kind: output, shape index: {}]
  %s2 = sld [smem:[#allocation0]]
  $region18: #{tpu_custom_call.1} parent=0
    _
  %s4 = ssub.s32 1, %s2
  %s5 = scalar_select 0, %s4, %s2
  $region1: #{tpu_custom_call.1} parent=0
    #allocation3 [shape = 'u8[8192]{0}', space=vmem, size = 0x2000, scoped, tag = 'input window, operand 0, single buffered']
    #allocation4 [shape = 's32[1]{0}', space=sflag, size = 0x4, scoped, tag = 'scoped memory for tpu_custom_call.1']
    %6 = vsyncpa [#allocation4], 0
    // Predicated region
    $region2: #{tpu_custom_call.1} parent=1 // pred_check
      _
    $region3: #{tpu_custom_call.1} parent=1 // pred_check_branch
      %8 = sbr.rel (0) target = $region5
    $region4: #{tpu_custom_call.1} parent=1 // pred_region
      %s10 = ssub.s32 256, 256
      %11 = vsyncadd [#allocation4], %s10
      %s13 = sshll.u32 [#allocation3], 4
      %s14 = int_to_ptr.vmem [resolvable:$true] %s13
      %16 = dma.hbm_to_vmem [thread:$0]  %s0, 256, %s14, [#allocation4]
    $region5: #{tpu_custom_call.1} parent=1 // pred_fallthru
      _
    // Predicated region
    $region6: #{tpu_custom_call.1} parent=1 // pred_check
      _
    $region7: #{tpu_custom_call.1} parent=1 // pred_check_branch
      %18 = sbr.rel (0) target = $region9
    $region8: #{tpu_custom_call.1} parent=1 // pred_region
      %19 = dma.done [#allocation4], 256
    $region9: #{tpu_custom_call.1} parent=1 // pred_fallthru
      _
    %v20 = vld [vmem:[#allocation3] sm:$0xff]
    %s21 = scalar_lea.vmem [#allocation3], 8
    %v22 = vld [vmem:[%s21] sm:$0xff]
    %v23 = vadd.f32 %v20, %v22
    %24 = vadd.xlane.f32.xlu0 %v23
    %v25 = vpop.xlane.xlu0 %24
    %v26 = vmul.f32 %v25, 0.00390625
    %vm27 = vcmask 7168
    %28 = vst.msk [vmem:[%s1] sm:$0xff] %vm27, %v26
    // Predicated region
    $region10: #{tpu_custom_call.1} parent=1 // pred_check
      _
    $region11: #{tpu_custom_call.1} parent=1 // pred_check_branch
      %30 = sbr.rel (0) target = $region13
    $region12: #{tpu_custom_call.1} parent=1 // pred_region
      _
    $region13: #{tpu_custom_call.1} parent=1 // pred_fallthru
      _
    // Predicated region
    $region14: #{tpu_custom_call.1} parent=1 // pred_check
      _
    $region15: #{tpu_custom_call.1} parent=1 // pred_check_branch
      %32 = sbr.rel (0) target = $region17
    $region16: #{tpu_custom_call.1} parent=1 // pred_region
      _
    $region17: #{tpu_custom_call.1} parent=1 // pred_fallthru
      _
    %33 = vsyncpa [#allocation4], 1

</llo_original>
